<compile_context>
chip_gen: v7x
topology: tpu7x:2x2x1
jax: 0.10.0
libtpu: 0.0.40
codegen_flags: <defaults>
</compile_context>

<pallas_src>
import jax
import jax.numpy as jnp
from jax.experimental import pallas as pl
from jax.experimental.pallas import tpu as pltpu


_LANE = 128
_ROW_ALIGN = 16          # sublane-safe for both f32 (8) and bf16 (16) blocks


def _round_up(n, m):
    return (n + m - 1) // m * m


def _cdiv(a, b):
    return -(-a // b)


# --------------------------------------------------------------------------- #
# Kernel
# --------------------------------------------------------------------------- #
def _dqn_kernel(x_ref, w1_ref, b1_ref, wva_ref, bva_ref, wh_ref, bh_ref, q_ref):
    wdt = w1_ref.dtype                                   # f32 or bf16 weights

    # fc1 + ReLU                                          (TB, H)
    h = jnp.dot(x_ref[...], w1_ref[...], preferred_element_type=jnp.float32)
    h = jnp.maximum(h + b1_ref[...], 0.0).astype(wdt)

    # fused value|advantage streams (H -> 512) + ReLU     (TB, 512)
    h2 = jnp.dot(h, wva_ref[...], preferred_element_type=jnp.float32)
    h2 = jnp.maximum(h2 + bva_ref[...], 0.0).astype(wdt)

    # fused dueling head: columns 0..A-1 already equal Q = V + A - mean(A)
    q = jnp.dot(h2, wh_ref[...], preferred_element_type=jnp.float32) + bh_ref[...]
    q_ref[...] = q.astype(q_ref.dtype)


# --------------------------------------------------------------------------- #
# Parameter fusion (run once, in f32, then optionally downcast)
# --------------------------------------------------------------------------- #
def prepare_fused_params(p, dtype=jnp.float32):
    """Folds the dueling arithmetic into fused, lane-dense weights."""
    action_dim = p["wadv"].shape[1]
    k_half = p["wval"].shape[0]                 # 256
    n_out = _round_up(action_dim, _LANE)        # lane-dense output width

    # One (hidden, 512) matmul instead of two (hidden, 256) matmuls.
    w_va = jnp.concatenate([p["wv"], p["wa"]], axis=1)
    b_va = jnp.concatenate([p["bv"], p["ba"]], axis=1)

    # Fold  Q = V + A - mean(A)  into the head weights (exact in f32):
    wadv_c = p["wadv"] - jnp.mean(p["wadv"], axis=1, keepdims=True)
    badv_c = p["badv"] - jnp.mean(p["badv"], axis=1, keepdims=True)

    w_head = jnp.zeros((2 * k_half, n_out), jnp.float32)
    w_head = w_head.at[:k_half, :action_dim].set(
        jnp.broadcast_to(p["wval"], (k_half, action_dim)))
    w_head = w_head.at[k_half:, :action_dim].set(wadv_c)

    b_head = jnp.zeros((1, n_out), jnp.float32)
    b_head = b_head.at[:, :action_dim].set(p["bval"] + badv_c)

    # Matmul operands in `dtype`; biases stay f32 (added post-accumulation).
    return dict(w1=p["w1"].astype(dtype), b1=p["b1"].astype(jnp.float32),
                w_va=w_va.astype(dtype), b_va=b_va.astype(jnp.float32),
                w_head=w_head.astype(dtype), b_head=b_head.astype(jnp.float32),
                action_dim=action_dim, n_out=n_out)


def _xla_forward(x, fused):
    """Plain-XLA path for tiny batches (same fused math, same accumulation)."""
    wdt = fused["w1"].dtype
    h = jax.nn.relu(jnp.dot(x, fused["w1"], preferred_element_type=jnp.float32)
                    + fused["b1"]).astype(wdt)
    h2 = jax.nn.relu(jnp.dot(h, fused["w_va"], preferred_element_type=jnp.float32)
                     + fused["b_va"]).astype(wdt)
    return jnp.dot(h2, fused["w_head"], preferred_element_type=jnp.float32) + fused["b_head"]


# --------------------------------------------------------------------------- #
# Wrapper
# --------------------------------------------------------------------------- #
def dqn_forward(x, fused, *, batch_tile=2048, use_xla_below=64,
                out_dtype=jnp.float32):
    """Runs the dueling-DQN forward pass; returns (batch, action_dim) Q."""
    batch, state_dim = x.shape
    action_dim = fused["action_dim"]
    n_out = fused["n_out"]
    hidden_dim = fused["w1"].shape[1]
    k_mid = fused["w_va"].shape[1]
    k_head = fused["w_head"].shape[0]
    wdt = fused["w1"].dtype

    x = x.astype(wdt)

    # Tiny batches: Pallas launch + single-grid-step overhead dominates and
    # the MXU runs at <1% utilization -> plain XLA is cheaper.
    if batch < use_xla_below:
        return _xla_forward(x, fused)[:, :action_dim].astype(out_dtype)

    # ---- batch-aware tile selection ---------------------------------------
    # Big tiles amortize the ~0.35 us/step overhead; split into >=2 steps
    # (when there is enough work) so both v7x TensorCores are busy; size the
    # tile from the actual batch so padding stays minimal.
    batch_r = _round_up(batch, _ROW_ALIGN)
    nsteps = max(1, _cdiv(batch_r, batch_tile))
    if batch_r >= 2 * _ROW_ALIGN:
        nsteps = max(nsteps, 2)
    tb = _round_up(_cdiv(batch_r, nsteps), _ROW_ALIGN)
    batch_p = _round_up(batch_r, tb)
    if batch_p != batch:
        x = jnp.pad(x, ((0, batch_p - batch), (0, 0)))

    # Advisory cost estimate so XLA can overlap this kernel with neighbours.
    w_bytes = sum(int(a.size) * a.dtype.itemsize
                  for a in (fused["w1"], fused["b1"], fused["w_va"],
                            fused["b_va"], fused["w_head"], fused["b_head"]))
    cost = pl.CostEstimate(
        flops=2 * batch_p * (state_dim * hidden_dim
                             + hidden_dim * k_mid
                             + k_head * n_out),
        transcendentals=0,
        bytes_accessed=(batch_p * state_dim * jnp.dtype(wdt).itemsize
                        + batch_p * n_out * jnp.dtype(out_dtype).itemsize
                        + w_bytes))

    pin = lambda i: (0, 0)   # weights stay resident in VMEM across grid steps

    q_full = pl.pallas_call(
        _dqn_kernel,
        out_shape=jax.ShapeDtypeStruct((batch_p, n_out), out_dtype),
        grid=(batch_p // tb,),
        in_specs=[
            pl.BlockSpec((tb, state_dim), lambda i: (i, 0)),     # x streams
            pl.BlockSpec((state_dim, hidden_dim), pin),
            pl.BlockSpec((1, hidden_dim), pin),
            pl.BlockSpec((hidden_dim, k_mid), pin),
            pl.BlockSpec((1, k_mid), pin),
            pl.BlockSpec((k_head, n_out), pin),
            pl.BlockSpec((1, n_out), pin),
        ],
        out_specs=pl.BlockSpec((tb, n_out), lambda i: (i, 0)),   # lane-dense q
        compiler_params=pltpu.CompilerParams(
            dimension_semantics=("parallel",),     # megacore-shard batch axis
            vmem_limit_bytes=64 * 1024 * 1024),    # headroom beyond v5e's 16MiB
        cost_estimate=cost,
    )(x, fused["w1"], fused["b1"], fused["w_va"], fused["b_va"],
      fused["w_head"], fused["b_head"])

    return q_full[:batch, :action_dim]


# --------------------------------------------------------------------------- #
# Params / reference
# --------------------------------------------------------------------------- #
def _linear_init(key, fan_in, fan_out):
    """Deterministic init mimicking nn.Linear default: U(-1/sqrt(fan_in), +)."""
    kw, kb = jax.random.split(key)
    bound = 1.0 / jnp.sqrt(jnp.float32(fan_in))
    w = jax.random.uniform(kw, (fan_in, fan_out), jnp.float32, -bound, bound)
    b = jax.random.uniform(kb, (1, fan_out), jnp.float32, -bound, bound)
    return w, b


def init_dqn_params(key, state_dim, action_dim, hidden_dim=32):
    k1, k2, k3, k4, k5 = jax.random.split(key, 5)
    w1, b1 = _linear_init(k1, state_dim, hidden_dim)
    wv, bv = _linear_init(k2, hidden_dim, 256)
    wval, bval = _linear_init(k3, 256, 1)
    wa, ba = _linear_init(k4, hidden_dim, 256)
    wadv, badv = _linear_init(k5, 256, action_dim)
    return dict(w1=w1, b1=b1, wv=wv, bv=bv, wval=wval, bval=bval,
                wa=wa, ba=ba, wadv=wadv, badv=badv)


def dqn_reference(x, p):
    """Pure-JAX reference matching the PyTorch forward exactly."""
    h = jax.nn.relu(x @ p["w1"] + p["b1"])
    v = jax.nn.relu(h @ p["wv"] + p["bv"])
    V = v @ p["wval"] + p["bval"]
    a = jax.nn.relu(h @ p["wa"] + p["ba"])
    A = a @ p["wadv"] + p["badv"]
    return V + A - jnp.mean(A, axis=1, keepdims=True)


# --------------------------------------------------------------------------- #
# Main
# --------------------------------------------------------------------------- #
if __name__ == "__main__":
    key = jax.random.PRNGKey(0)
    k_params, k_x, k_x2 = jax.random.split(key, 3)

    batch, state_dim, action_dim, hidden_dim = 8, 16, 4, 32
    params = init_dqn_params(k_params, state_dim, action_dim, hidden_dim)

    # f32 fused weights: exact parity with the reference.
    fused_f32 = prepare_fused_params(params, dtype=jnp.float32)

    # (a) small-shape check, Pallas kernel forced (single grid step)
    x = jax.random.normal(k_x, (batch, state_dim), jnp.float32)
    q_ref = dqn_reference(x, params)
    q = jax.block_until_ready(dqn_forward(x, fused_f32, use_xla_below=0))
    assert q.shape == (batch, action_dim)
    assert jnp.allclose(q, q_ref, atol=1e-4, rtol=1e-4), "mismatch (small, pallas)"

    # (b) default dispatch: tiny batch takes the plain-XLA path
    q_d = jax.block_until_ready(dqn_forward(x, fused_f32))
    assert jnp.allclose(q_d, q_ref, atol=1e-4, rtol=1e-4), "mismatch (small, xla)"

    # (c) tiled / padded path: grid >= 2 (both v7x TensorCores busy)
    x2 = jax.random.normal(k_x2, (1000, state_dim), jnp.float32)
    q2 = jax.block_until_ready(dqn_forward(x2, fused_f32))
    q2_ref = dqn_reference(x2, params)
    assert q2.shape == (1000, action_dim)
    assert jnp.allclose(q2, q2_ref, atol=1e-4, rtol=1e-4), "mismatch (tiled, f32)"

    # (d) bf16 fast path (v6e/v7x): bf16 x/weights + bf16 q store, f32 accum
    fused_bf16 = prepare_fused_params(params, dtype=jnp.bfloat16)
    q3 = jax.block_until_ready(
        dqn_forward(x2, fused_bf16, out_dtype=jnp.bfloat16))
    assert q3.shape == (1000, action_dim)
    assert jnp.allclose(q3.astype(jnp.float32), q2_ref, atol=1e-1, rtol=1e-1), \
        "mismatch (tiled, bf16)"

    print("KERNEL_OK")
</pallas_src>

<mosaic_0001>
module attributes {stable_mosaic.version = 11 : i64} {
  func.func @_dqn_kernel(%arg0: i32, %arg1: memref<16x16xf32, #tpu.memory_space<vmem>>, %arg2: memref<16x32xf32, #tpu.memory_space<vmem>>, %arg3: memref<1x32xf32, #tpu.memory_space<vmem>>, %arg4: memref<32x512xf32, #tpu.memory_space<vmem>>, %arg5: memref<1x512xf32, #tpu.memory_space<vmem>>, %arg6: memref<512x128xf32, #tpu.memory_space<vmem>>, %arg7: memref<1x128xf32, #tpu.memory_space<vmem>>, %arg8: memref<16x128xf32, #tpu.memory_space<vmem>>) attributes {dimension_semantics = [#tpu.dimension_semantics<parallel>], iteration_bounds = array<i64: 1>, scalar_prefetch = 0 : i64, scratch_operands = 0 : i64, tpu.core_type = #tpu.core_type<tc>, window_params = [{transform_indices = @transform_0, window_bounds = array<i64: 16, 16>}, {pipeline_mode = #tpu.pipeline_mode<synchronous>, transform_indices = @transform_1, window_bounds = array<i64: 16, 32>}, {pipeline_mode = #tpu.pipeline_mode<synchronous>, transform_indices = @transform_2, window_bounds = array<i64: 1, 32>}, {pipeline_mode = #tpu.pipeline_mode<synchronous>, transform_indices = @transform_3, window_bounds = array<i64: 32, 512>}, {pipeline_mode = #tpu.pipeline_mode<synchronous>, transform_indices = @transform_4, window_bounds = array<i64: 1, 512>}, {pipeline_mode = #tpu.pipeline_mode<synchronous>, transform_indices = @transform_5, window_bounds = array<i64: 512, 128>}, {pipeline_mode = #tpu.pipeline_mode<synchronous>, transform_indices = @transform_6, window_bounds = array<i64: 1, 128>}, {transform_indices = @transform_7, window_bounds = array<i64: 16, 128>}]} {
    %c0 = arith.constant 0 : index
    %c0_0 = arith.constant 0 : index
    %0 = vector.load %arg1[%c0, %c0_0] : memref<16x16xf32, #tpu.memory_space<vmem>>, vector<16x16xf32>
    %c0_1 = arith.constant 0 : index
    %c0_2 = arith.constant 0 : index
    %1 = vector.load %arg2[%c0_1, %c0_2] : memref<16x32xf32, #tpu.memory_space<vmem>>, vector<16x32xf32>
    %cst = arith.constant dense<0.000000e+00> : vector<16x32xf32>
    %2 = tpu.matmul %0, %1, %cst {dimension_numbers = #tpu.dot_dimension_numbers<[1], [0], [0], [1], [0, 0, 1, 1], [], []>} : vector<16x16xf32>, vector<16x32xf32>, vector<16x32xf32> -> vector<16x32xf32>
    %c0_3 = arith.constant 0 : index
    %c0_4 = arith.constant 0 : index
    %3 = vector.load %arg3[%c0_3, %c0_4] : memref<1x32xf32, #tpu.memory_space<vmem>>, vector<1x32xf32>
    %4 = vector.broadcast %3 : vector<1x32xf32> to vector<16x32xf32>
    %5 = arith.addf %2, %4 : vector<16x32xf32>
    %cst_5 = arith.constant 0.000000e+00 : f32
    %6 = vector.broadcast %cst_5 : f32 to vector<16x32xf32>
    %7 = arith.maximumf %5, %6 : vector<16x32xf32>
    %c0_6 = arith.constant 0 : index
    %c0_7 = arith.constant 0 : index
    %8 = vector.load %arg4[%c0_6, %c0_7] : memref<32x512xf32, #tpu.memory_space<vmem>>, vector<32x512xf32>
    %cst_8 = arith.constant dense<0.000000e+00> : vector<16x512xf32>
    %9 = tpu.matmul %7, %8, %cst_8 {dimension_numbers = #tpu.dot_dimension_numbers<[1], [0], [0], [1], [0, 0, 1, 1], [], []>} : vector<16x32xf32>, vector<32x512xf32>, vector<16x512xf32> -> vector<16x512xf32>
    %c0_9 = arith.constant 0 : index
    %c0_10 = arith.constant 0 : index
    %10 = vector.load %arg5[%c0_9, %c0_10] : memref<1x512xf32, #tpu.memory_space<vmem>>, vector<1x512xf32>
    %11 = vector.broadcast %10 : vector<1x512xf32> to vector<16x512xf32>
    %12 = arith.addf %9, %11 : vector<16x512xf32>
    %cst_11 = arith.constant 0.000000e+00 : f32
    %13 = vector.broadcast %cst_11 : f32 to vector<16x512xf32>
    %14 = arith.maximumf %12, %13 : vector<16x512xf32>
    %c0_12 = arith.constant 0 : index
    %c0_13 = arith.constant 0 : index
    %15 = vector.load %arg6[%c0_12, %c0_13] : memref<512x128xf32, #tpu.memory_space<vmem>>, vector<512x128xf32>
    %cst_14 = arith.constant dense<0.000000e+00> : vector<16x128xf32>
    %16 = tpu.matmul %14, %15, %cst_14 {dimension_numbers = #tpu.dot_dimension_numbers<[1], [0], [0], [1], [0, 0, 1, 1], [], []>} : vector<16x512xf32>, vector<512x128xf32>, vector<16x128xf32> -> vector<16x128xf32>
    %c0_15 = arith.constant 0 : index
    %c0_16 = arith.constant 0 : index
    %17 = vector.load %arg7[%c0_15, %c0_16] : memref<1x128xf32, #tpu.memory_space<vmem>>, vector<1x128xf32>
    %18 = vector.broadcast %17 : vector<1x128xf32> to vector<16x128xf32>
    %19 = arith.addf %16, %18 : vector<16x128xf32>
    %c0_17 = arith.constant 0 : index
    %c0_18 = arith.constant 0 : index
    %20 = vector.load %arg8[%c0_17, %c0_18] : memref<16x128xf32, #tpu.memory_space<vmem>>, vector<16x128xf32>
    tpu.vector_store %arg8[%c0_17, %c0_18], %19 {strides = array<i32>} : memref<16x128xf32, #tpu.memory_space<vmem>>, vector<16x128xf32>,
    return
  }
  func.func @transform_0(%arg0: i32) -> (i32, i32) {
    %c0_i32 = arith.constant 0 : i32
    %c0_i32_0 = arith.constant 0 : i32
    return %arg0, %c0_i32 : i32, i32
  }
  func.func @transform_1(%arg0: i32) -> (i32, i32) {
    %c0_i32 = arith.constant 0 : i32
    %c0_i32_0 = arith.constant 0 : i32
    %c0_i32_1 = arith.constant 0 : i32
    return %c0_i32, %c0_i32_0 : i32, i32
  }
  func.func @transform_2(%arg0: i32) -> (i32, i32) {
    %c0_i32 = arith.constant 0 : i32
    %c0_i32_0 = arith.constant 0 : i32
    %c0_i32_1 = arith.constant 0 : i32
    return %c0_i32, %c0_i32_0 : i32, i32
  }
  func.func @transform_3(%arg0: i32) -> (i32, i32) {
    %c0_i32 = arith.constant 0 : i32
    %c0_i32_0 = arith.constant 0 : i32
    %c0_i32_1 = arith.constant 0 : i32
    return %c0_i32, %c0_i32_0 : i32, i32
  }
  func.func @transform_4(%arg0: i32) -> (i32, i32) {
    %c0_i32 = arith.constant 0 : i32
    %c0_i32_0 = arith.constant 0 : i32
    %c0_i32_1 = arith.constant 0 : i32
    return %c0_i32, %c0_i32_0 : i32, i32
  }
  func.func @transform_5(%arg0: i32) -> (i32, i32) {
    %c0_i32 = arith.constant 0 : i32
    %c0_i32_0 = arith.constant 0 : i32
    %c0_i32_1 = arith.constant 0 : i32
    return %c0_i32, %c0_i32_0 : i32, i32
  }
  func.func @transform_6(%arg0: i32) -> (i32, i32) {
    %c0_i32 = arith.constant 0 : i32
    %c0_i32_0 = arith.constant 0 : i32
    %c0_i32_1 = arith.constant 0 : i32
    return %c0_i32, %c0_i32_0 : i32, i32
  }
  func.func @transform_7(%arg0: i32) -> (i32, i32) {
    %c0_i32 = arith.constant 0 : i32
    %c0_i32_0 = arith.constant 0 : i32
    return %arg0, %c0_i32 : i32, i32
  }
}

</mosaic_0001>

<llo_original>
// kernel: tpu_custom_call.1
$region0: #{tpu_custom_call.1}
  #allocation0 [shape = 'u32[]', space=smem, size = 0x4, offset = 0x4, fixed_abs, tag = 'smem constant byte address 0x4 - core index']
  #allocation1 [shape = 'u32[144,128]{1,0:T(1,128)}', space=vmem, size = 0x12000, scoped, tag = 'internal scratch']
  %s0 = inlined_call_operand.hbm [shape: f32[16,16], index: 0, kind: input, shape index: {}]
  %s1 = inlined_call_operand.hbm [shape: f32[16,32], index: 1, kind: input, shape index: {}]
  %s2 = inlined_call_operand.hbm [shape: f32[1,32], index: 2, kind: input, shape index: {}]
  %s3 = inlined_call_operand.hbm [shape: f32[32,512], index: 3, kind: input, shape index: {}]
  %s4 = inlined_call_operand.hbm [shape: f32[1,512], index: 4, kind: input, shape index: {}]
  %s5 = inlined_call_operand.hbm [shape: f32[512,128], index: 5, kind: input, shape index: {}]
  %s6 = inlined_call_operand.hbm [shape: f32[1,128], index: 6, kind: input, shape index: {}]
  %s7 = inlined_call_operand.hbm [shape: f32[16,128], index: 7, kind: output, shape index: {}]
  %s8 = sld [smem:[#allocation0]]
  $region66: #{tpu_custom_call.1} parent=0
    _
  %s10 = ssub.s32 1, %s8
  %s11 = scalar_select 0, %s10, %s8
  $region1: #{tpu_custom_call.1} parent=0
    #allocation2 [shape = 'u8[8192]{0}', space=vmem, size = 0x2000, scoped, tag = 'input window, operand 0, single buffered']
    #allocation3 [shape = 's32[1]{0}', space=sflag, size = 0x4, scoped, tag = 'scoped memory for tpu_custom_call.1']
    #allocation4 [shape = 's32[1]{0}', space=sflag, size = 0x4, scoped, tag = 'scoped memory for tpu_custom_call.1']
    #allocation5 [shape = 'u8[8192]{0}', space=vmem, size = 0x2000, scoped, tag = 'input window, operand 1, single buffered']
    #allocation6 [shape = 's32[1]{0}', space=sflag, size = 0x4, scoped, tag = 'scoped memory for tpu_custom_call.1']
    #allocation7 [shape = 'u8[512]{0}', space=vmem, size = 0x400, scoped, tag = 'input window, operand 2, single buffered']
    #allocation8 [shape = 'u8[65536]{0}', space=vmem, size = 0x10000, scoped, tag = 'input window, operand 3, single buffered']
    #allocation9 [shape = 's32[1]{0}', space=sflag, size = 0x4, scoped, tag = 'scoped memory for tpu_custom_call.1']
    #allocation10 [shape = 'u8[2048]{0}', space=vmem, size = 0x800, scoped, tag = 'input window, operand 4, single buffered']
    #allocation11 [shape = 'u8[262144]{0}', space=vmem, size = 0x40000, scoped, tag = 'input window, operand 5, single buffered']
    #allocation12 [shape = 's32[1]{0}', space=sflag, size = 0x4, scoped, tag = 'scoped memory for tpu_custom_call.1']
    #allocation13 [shape = 'u8[512]{0}', space=vmem, size = 0x400, scoped, tag = 'input window, operand 6, single buffered']
    #allocation14 [shape = 'u8[8192]{0}', space=vmem, size = 0x2000, scoped, tag = 'output window, operand 0, single buffered']
    %12 = vsyncpa [#allocation3], 0
    %13 = vsyncpa [#allocation6], 0
    %14 = vsyncpa [#allocation9], 0
    %15 = vsyncpa [#allocation12], 0
    %16 = vsyncpa [#allocation4], 0
    // Predicated region
    $region2: #{tpu_custom_call.1} parent=1 // pred_check
      _
    $region3: #{tpu_custom_call.1} parent=1 // pred_check_branch
      %18 = sbr.rel (0) target = $region5
    $region4: #{tpu_custom_call.1} parent=1 // pred_region
      %s20 = ssub.s32 256, 256
      %21 = vsyncadd [#allocation3], %s20
      %s22 = sshll.u32 [#allocation2], 4
      %s23 = int_to_ptr.vmem [resolvable:$true] %s22
      %28 = dma.hbm_to_vmem [thread:$0]  %s0, 256, %s23, [#allocation3], 128, 128, 8
    $region5: #{tpu_custom_call.1} parent=1 // pred_fallthru
      _
    // Predicated region
    $region6: #{tpu_custom_call.1} parent=1 // pred_check
      _
    $region7: #{tpu_custom_call.1} parent=1 // pred_check_branch
      %30 = sbr.rel (0) target = $region9
    $region8: #{tpu_custom_call.1} parent=1 // pred_region
      %s32 = ssub.s32 256, 256
      %33 = vsyncadd [#allocation6], %s32
      %s34 = sshll.u32 [#allocation5], 4
      %s35 = int_to_ptr.vmem [resolvable:$true] %s34
      %40 = dma.hbm_to_vmem [thread:$0]  %s1, 256, %s35, [#allocation6], 128, 128, 8
    $region9: #{tpu_custom_call.1} parent=1 // pred_fallthru
      _
    // Predicated region
    $region10: #{tpu_custom_call.1} parent=1 // pred_check
      _
    $region11: #{tpu_custom_call.1} parent=1 // pred_check_branch
      %42 = sbr.rel (0) target = $region13
    $region12: #{tpu_custom_call.1} parent=1 // pred_region
      %s44 = ssub.s32 16, 16
      %45 = vsyncadd [#allocation6], %s44
      %s47 = sshll.u32 [#allocation7], 4
      %s48 = int_to_ptr.vmem [resolvable:$true] %s47
      %50 = dma.hbm_to_vmem [thread:$0]  %s2, 16, %s48, [#allocation6]
    $region13: #{tpu_custom_call.1} parent=1 // pred_fallthru
      _
    // Predicated region
    $region14: #{tpu_custom_call.1} parent=1 // pred_check
      _
    $region15: #{tpu_custom_call.1} parent=1 // pred_check_branch
      %52 = sbr.rel (0) target = $region17
    $region16: #{tpu_custom_call.1} parent=1 // pred_region
      %s54 = ssub.s32 2048, 2048
      %55 = vsyncadd [#allocation9], %s54
      %s56 = sshll.u32 [#allocation8], 4
      %s57 = int_to_ptr.vmem [resolvable:$true] %s56
      %62 = dma.hbm_to_vmem [thread:$0]  %s3, 2048, %s57, [#allocation9], 512, 512, 32
    $region17: #{tpu_custom_call.1} parent=1 // pred_fallthru
      _
    // Predicated region
    $region18: #{tpu_custom_call.1} parent=1 // pred_check
      _
    $region19: #{tpu_custom_call.1} parent=1 // pred_check_branch
      %64 = sbr.rel (0) target = $region21
    $region20: #{tpu_custom_call.1} parent=1 // pred_region
      %s66 = ssub.s32 64, 64
      %67 = vsyncadd [#allocation9], %s66
      %s69 = sshll.u32 [#allocation10], 4
      %s70 = int_to_ptr.vmem [resolvable:$true] %s69
      %72 = dma.hbm_to_vmem [thread:$0]  %s4, 64, %s70, [#allocation9]
    $region21: #{tpu_custom_call.1} parent=1 // pred_fallthru
      _
    // Predicated region
    $region22: #{tpu_custom_call.1} parent=1 // pred_check
      _
    $region23: #{tpu_custom_call.1} parent=1 // pred_check_branch
      %74 = sbr.rel (0) target = $region25
    $region24: #{tpu_custom_call.1} parent=1 // pred_region
      %s76 = ssub.s32 8192, 8192
      %77 = vsyncadd [#allocation12], %s76
      %s78 = sshll.u32 [#allocation11], 4
      %s79 = int_to_ptr.vmem [resolvable:$true] %s78
      %84 = dma.hbm_to_vmem [thread:$0]  %s5, 8192, %s79, [#allocation12], 128, 128, 8
    $region25: #{tpu_custom_call.1} parent=1 // pred_fallthru
      _
    // Predicated region
    $region26: #{tpu_custom_call.1} parent=1 // pred_check
      _
    $region27: #{tpu_custom_call.1} parent=1 // pred_check_branch
      %86 = sbr.rel (0) target = $region29
    $region28: #{tpu_custom_call.1} parent=1 // pred_region
      %s88 = ssub.s32 16, 16
      %89 = vsyncadd [#allocation12], %s88
      %s91 = sshll.u32 [#allocation13], 4
      %s92 = int_to_ptr.vmem [resolvable:$true] %s91
      %94 = dma.hbm_to_vmem [thread:$0]  %s6, 16, %s92, [#allocation12]
    $region29: #{tpu_custom_call.1} parent=1 // pred_fallthru
      _
    // Predicated region
    $region30: #{tpu_custom_call.1} parent=1 // pred_check
      _
    $region31: #{tpu_custom_call.1} parent=1 // pred_check_branch
      %96 = sbr.rel (0) target = $region33
    $region32: #{tpu_custom_call.1} parent=1 // pred_region
      %97 = dma.done [#allocation3], 256
    $region33: #{tpu_custom_call.1} parent=1 // pred_fallthru
      _
    // Predicated region
    $region34: #{tpu_custom_call.1} parent=1 // pred_check
      _
    $region35: #{tpu_custom_call.1} parent=1 // pred_check_branch
      %99 = sbr.rel (0) target = $region37
    $region36: #{tpu_custom_call.1} parent=1 // pred_region
      %100 = dma.done [#allocation6], 256
    $region37: #{tpu_custom_call.1} parent=1 // pred_fallthru
      _
    // Predicated region
    $region38: #{tpu_custom_call.1} parent=1 // pred_check
      _
    $region39: #{tpu_custom_call.1} parent=1 // pred_check_branch
      %102 = sbr.rel (0) target = $region41
    $region40: #{tpu_custom_call.1} parent=1 // pred_region
      %103 = dma.done [#allocation6], 16
    $region41: #{tpu_custom_call.1} parent=1 // pred_fallthru
      _
    // Predicated region
    $region42: #{tpu_custom_call.1} parent=1 // pred_check
      _
    $region43: #{tpu_custom_call.1} parent=1 // pred_check_branch
      %105 = sbr.rel (0) target = $region45
    $region44: #{tpu_custom_call.1} parent=1 // pred_region
      %106 = dma.done [#allocation9], 2048
    $region45: #{tpu_custom_call.1} parent=1 // pred_fallthru
      _
    // Predicated region
    $region46: #{tpu_custom_call.1} parent=1 // pred_check
      _
    $region47: #{tpu_custom_call.1} parent=1 // pred_check_branch
      %108 = sbr.rel (0) target = $region49
    $region48: #{tpu_custom_call.1} parent=1 // pred_region
      %109 = dma.done [#allocation9], 64
    $region49: #{tpu_custom_call.1} parent=1 // pred_fallthru
      _
    // Predicated region
    $region50: #{tpu_custom_call.1} parent=1 // pred_check
      _
    $region51: #{tpu_custom_call.1} parent=1 // pred_check_branch
      %111 = sbr.rel (0) target = $region53
    $region52: #{tpu_custom_call.1} parent=1 // pred_region
      %112 = dma.done [#allocation12], 8192
    $region53: #{tpu_custom_call.1} parent=1 // pred_fallthru
      _
    // Predicated region
    $region54: #{tpu_custom_call.1} parent=1 // pred_check
      _
    $region55: #{tpu_custom_call.1} parent=1 // pred_check_branch
      %114 = sbr.rel (0) target = $region57
    $region56: #{tpu_custom_call.1} parent=1 // pred_region
      %115 = dma.done [#allocation12], 16
    $region57: #{tpu_custom_call.1} parent=1 // pred_fallthru
      _
    %v116 = vld [vmem:[#allocation2] sm:$0xff]
    %v117 = vld [vmem:[#allocation2 + $0x8] sm:$0xff]
    %v118 = vld [vmem:[#allocation5] sm:$0xff]
    %v119 = vld [vmem:[#allocation5 + $0x8] sm:$0xff]
    %v120 = vld [vmem:[#allocation7] sm:$0x1]
    %v122 = vlaneseq
    %v123 = vshrl.u32 %v122, 7
    %v124 = vsub.s32 0, %v123
    %v125 = vrot.slane %v120, %v124
    %vm127 = vcmask 130048
    %v129 = vsel %vm127, %v116, 0
    %v132 = vsel %vm127, %v117, 0
    %134 = vmatprep.subr.mxu0 0.0
    %135 = vmatpush1.msra.mxu0 %v118
    %136 = vmatprep.subr.mxu0 0.0
    %137 = vmatpush1.msra.mxu0 %v119
    %138 = vmatprep.subr.mxu0 0.0
    %139 = vmatpush1.msra.mxu0 0.0
    %140 = vmatprep.subr.mxu0 0.0
    %141 = vmatpush1.msra.mxu0 0.0
    %142 = vmatprep.subr.mxu0 0.0
    %143 = vmatpush1.msra.mxu0 0.0
    %144 = vmatprep.subr.mxu0 0.0
    %145 = vmatpush1.msra.mxu0 0.0
    %146 = vmatprep.subr.mxu0 0.0
    %147 = vmatpush1.msra.mxu0 0.0
    %148 = vmatprep.subr.mxu0 0.0
    %149 = vmatpush1.msra.mxu0 0.0
    %150 = vmatprep.subr.mxu0 0.0
    %151 = vmatpush1.msra.mxu0 0.0
    %152 = vmatprep.subr.mxu0 0.0
    %153 = vmatpush1.msra.mxu0 0.0
    %154 = vmatprep.subr.mxu0 0.0
    %155 = vmatpush1.msra.mxu0 0.0
    %156 = vmatprep.subr.mxu0 0.0
    %157 = vmatpush1.msra.mxu0 0.0
    %158 = vmatprep.subr.mxu0 0.0
    %159 = vmatpush1.msra.mxu0 0.0
    %160 = vmatprep.subr.mxu0 0.0
    %161 = vmatpush1.msra.mxu0 0.0
    %162 = vmatprep.subr.mxu0 0.0
    %163 = vmatpush1.msra.mxu0 0.0
    %164 = vmatprep.subr.mxu0 0.0
    %165 = vmatpush1.msra.mxu0 0.0
    %166 = vmatprep.subr.mxu0 0.0
    %167 = vmatpush1.msra.mxu0 0.0
    %168 = vmatprep.subr.mxu0 0.0
    %169 = vmatpush1.msra.mxu0 0.0
    %170 = vmatprep.subr.mxu0 0.0
    %171 = vmatpush1.msra.mxu0 0.0
    %172 = vmatprep.subr.mxu0 0.0
    %173 = vmatpush1.msra.mxu0 0.0
    %174 = vmatprep.subr.mxu0 0.0
    %175 = vmatpush1.msra.mxu0 0.0
    %176 = vmatprep.subr.mxu0 0.0
    %177 = vmatpush1.msra.mxu0 0.0
    %178 = vmatprep.subr.mxu0 0.0
    %179 = vmatpush1.msra.mxu0 0.0
    %180 = vmatprep.subr.mxu0 0.0
    %181 = vmatpush1.msra.mxu0 0.0
    %182 = vmatprep.subr.mxu0 0.0
    %183 = vmatpush1.msra.mxu0 0.0
    %184 = vmatprep.subr.mxu0 0.0
    %185 = vmatpush1.msra.mxu0 0.0
    %186 = vmatprep.subr.mxu0 0.0
    %187 = vmatpush1.msra.mxu0 0.0
    %188 = vmatprep.subr.mxu0 0.0
    %189 = vmatpush1.msra.mxu0 0.0
    %190 = vmatprep.subr.mxu0 0.0
    %191 = vmatpush1.msra.mxu0 0.0
    %192 = vmatprep.subr.mxu0 0.0
    %193 = vmatpush1.msra.mxu0 0.0
    %194 = vmatprep.subr.mxu0 0.0
    %195 = vmatpush1.msra.mxu0 0.0
    %196 = vmatprep.subr.mxu0 0.0
    %197 = vmatpush1.msra.mxu0 0.0
    %198 = vmatprep.mubr.f32.mxu0 0.0
    %199 = vmatmul.mubr.f32.gmra.mrb[0].mxu0 %v129
    %v200 = vpop.f32.mrb[0].mxu0
    %v201 = vadd.f32 %v125, %v200
    %v202 = vpop.f32.mrb[0].mxu0
    %203 = vmatprep.mubr.f32.mxu0 0.0
    %204 = vmatmul.mubr.f32.gmra.mrb[0].mxu0 %v132
    %v205 = vpop.f32.mrb[0].mxu0
    %v206 = vadd.f32 %v125, %v205
    %v207 = vpop.f32.mrb[0].mxu0
    %208 = vdwg.mxu0
    %v209 = vmax.f32 %v201, 0.0
    %v210 = vmax.f32 %v206, 0.0
    %v211 = vld [vmem:[#allocation8] sm:$0xff]
    %v212 = vld [vmem:[#allocation8 + $0x8] sm:$0xff]
    %v213 = vld [vmem:[#allocation8 + $0x10] sm:$0xff]
    %v214 = vld [vmem:[#allocation8 + $0x18] sm:$0xff]
    %v215 = vld [vmem:[#allocation8 + $0x20] sm:$0xff]
    %v216 = vld [vmem:[#allocation8 + $0x28] sm:$0xff]
    %v217 = vld [vmem:[#allocation8 + $0x30] sm:$0xff]
    %v218 = vld [vmem:[#allocation8 + $0x38] sm:$0xff]
    %v219 = vld [vmem:[#allocation8 + $0x40] sm:$0xff]
    %v220 = vld [vmem:[#allocation8 + $0x48] sm:$0xff]
    %v221 = vld [vmem:[#allocation8 + $0x50] sm:$0xff]
    %v222 = vld [vmem:[#allocation8 + $0x58] sm:$0xff]
    %v223 = vld [vmem:[#allocation8 + $0x60] sm:$0xff]
    %v224 = vld [vmem:[#allocation8 + $0x68] sm:$0xff]
    %v225 = vld [vmem:[#allocation8 + $0x70] sm:$0xff]
    %v226 = vld [vmem:[#allocation8 + $0x78] sm:$0xff]
    %v227 = vld [vmem:[#allocation10] sm:$0xf]
    %v229 = vlaneseq
    %v230 = vshrl.u32 %v229, 7
    %v231 = vsub.s32 0, %v230
    %v232 = vrot.slane %v227, %v231
    %v233 = vlaneseq
    %v234 = vshrl.u32 %v233, 7
    %v235 = vsub.s32 1, %v234
    %v236 = vrot.slane %v227, %v235
    %v237 = vlaneseq
    %v238 = vshrl.u32 %v237, 7
    %v239 = vsub.s32 2, %v238
    %v240 = vrot.slane %v227, %v239
    %v241 = vlaneseq
    %v242 = vshrl.u32 %v241, 7
    %v243 = vsub.s32 3, %v242
    %v244 = vrot.slane %v227, %v243
    %vm249 = vcmask 261120
    %v251 = vsel %vm249, %v209, 0
    %v254 = vsel %vm249, %v210, 0
    %256 = vmatprep.subr.mxu0 %v212
    %257 = vmatpush1.msra.mxu0 %v211
    %258 = vmatprep.subr.mxu0 %v216
    %259 = vmatpush1.msra.mxu0 %v215
    %260 = vmatprep.subr.mxu0 %v220
    %261 = vmatpush1.msra.mxu0 %v219
    %262 = vmatprep.subr.mxu0 %v224
    %263 = vmatpush1.msra.mxu0 %v223
    %264 = vmatprep.subr.mxu0 0.0
    %265 = vmatpush1.msra.mxu0 0.0
    %266 = vmatprep.subr.mxu0 0.0
    %267 = vmatpush1.msra.mxu0 0.0
    %268 = vmatprep.subr.mxu0 0.0
    %269 = vmatpush1.msra.mxu0 0.0
    %270 = vmatprep.subr.mxu0 0.0
    %271 = vmatpush1.msra.mxu0 0.0
    %272 = vmatprep.subr.mxu0 0.0
    %273 = vmatpush1.msra.mxu0 0.0
    %274 = vmatprep.subr.mxu0 0.0
    %275 = vmatpush1.msra.mxu0 0.0
    %276 = vmatprep.subr.mxu0 0.0
    %277 = vmatpush1.msra.mxu0 0.0
    %278 = vmatprep.subr.mxu0 0.0
    %279 = vmatpush1.msra.mxu0 0.0
    %280 = vmatprep.subr.mxu0 0.0
    %281 = vmatpush1.msra.mxu0 0.0
    %282 = vmatprep.subr.mxu0 0.0
    %283 = vmatpush1.msra.mxu0 0.0
    %284 = vmatprep.subr.mxu0 0.0
    %285 = vmatpush1.msra.mxu0 0.0
    %286 = vmatprep.subr.mxu0 0.0
    %287 = vmatpush1.msra.mxu0 0.0
    %288 = vmatprep.subr.mxu0 0.0
    %289 = vmatpush1.msra.mxu0 0.0
    %290 = vmatprep.subr.mxu0 0.0
    %291 = vmatpush1.msra.mxu0 0.0
    %292 = vmatprep.subr.mxu0 0.0
    %293 = vmatpush1.msra.mxu0 0.0
    %294 = vmatprep.subr.mxu0 0.0
    %295 = vmatpush1.msra.mxu0 0.0
    %296 = vmatprep.subr.mxu0 0.0
    %297 = vmatpush1.msra.mxu0 0.0
    %298 = vmatprep.subr.mxu0 0.0
    %299 = vmatpush1.msra.mxu0 0.0
    %300 = vmatprep.subr.mxu0 0.0
    %301 = vmatpush1.msra.mxu0 0.0
    %302 = vmatprep.subr.mxu0 0.0
    %303 = vmatpush1.msra.mxu0 0.0
    %304 = vmatprep.subr.mxu0 0.0
    %305 = vmatpush1.msra.mxu0 0.0
    %306 = vmatprep.subr.mxu0 0.0
    %307 = vmatpush1.msra.mxu0 0.0
    %308 = vmatprep.subr.mxu0 0.0
    %309 = vmatpush1.msra.mxu0 0.0
    %310 = vmatprep.subr.mxu0 0.0
    %311 = vmatpush1.msra.mxu0 0.0
    %312 = vmatprep.subr.mxu0 0.0
    %313 = vmatpush1.msra.mxu0 0.0
    %314 = vmatprep.subr.mxu0 0.0
    %315 = vmatpush1.msra.mxu0 0.0
    %316 = vmatprep.subr.mxu0 0.0
    %317 = vmatpush1.msra.mxu0 0.0
    %318 = vmatprep.subr.mxu0 0.0
    %319 = vmatpush1.msra.mxu0 0.0
    %320 = vmatprep.mubr.f32.mxu0 0.0
    %321 = vmatmul.mubr.f32.gmra.mrb[0].mxu0 %v251
    %v322 = vpop.f32.mrb[0].mxu0
    %v323 = vadd.f32 %v232, %v322
    %v324 = vpop.f32.mrb[0].mxu0
    %v325 = vadd.f32 %v236, %v324
    %326 = vmatprep.mubr.f32.mxu0 0.0
    %327 = vmatmul.mubr.f32.gmra.mrb[0].mxu0 %v254
    %v328 = vpop.f32.mrb[0].mxu0
    %v329 = vadd.f32 %v232, %v328
    %v330 = vpop.f32.mrb[0].mxu0
    %v331 = vadd.f32 %v236, %v330
    %332 = vdwg.mxu0
    %333 = vmatprep.subr.mxu0 %v214
    %334 = vmatpush1.msra.mxu0 %v213
    %335 = vmatprep.subr.mxu0 %v218
    %336 = vmatpush1.msra.mxu0 %v217
    %337 = vmatprep.subr.mxu0 %v222
    %338 = vmatpush1.msra.mxu0 %v221
    %339 = vmatprep.subr.mxu0 %v226
    %340 = vmatpush1.msra.mxu0 %v225
    %341 = vmatprep.subr.mxu0 0.0
    %342 = vmatpush1.msra.mxu0 0.0
    %343 = vmatprep.subr.mxu0 0.0
    %344 = vmatpush1.msra.mxu0 0.0
    %345 = vmatprep.subr.mxu0 0.0
    %346 = vmatpush1.msra.mxu0 0.0
    %347 = vmatprep.subr.mxu0 0.0
    %348 = vmatpush1.msra.mxu0 0.0
    %349 = vmatprep.subr.mxu0 0.0
    %350 = vmatpush1.msra.mxu0 0.0
    %351 = vmatprep.subr.mxu0 0.0
    %352 = vmatpush1.msra.mxu0 0.0
    %353 = vmatprep.subr.mxu0 0.0
    %354 = vmatpush1.msra.mxu0 0.0
    %355 = vmatprep.subr.mxu0 0.0
    %356 = vmatpush1.msra.mxu0 0.0
    %357 = vmatprep.subr.mxu0 0.0
    %358 = vmatpush1.msra.mxu0 0.0
    %359 = vmatprep.subr.mxu0 0.0
    %360 = vmatpush1.msra.mxu0 0.0
    %361 = vmatprep.subr.mxu0 0.0
    %362 = vmatpush1.msra.mxu0 0.0
    %363 = vmatprep.subr.mxu0 0.0
    %364 = vmatpush1.msra.mxu0 0.0
    %365 = vmatprep.subr.mxu0 0.0
    %366 = vmatpush1.msra.mxu0 0.0
    %367 = vmatprep.subr.mxu0 0.0
    %368 = vmatpush1.msra.mxu0 0.0
    %369 = vmatprep.subr.mxu0 0.0
    %370 = vmatpush1.msra.mxu0 0.0
    %371 = vmatprep.subr.mxu0 0.0
    %372 = vmatpush1.msra.mxu0 0.0
    %373 = vmatprep.subr.mxu0 0.0
    %374 = vmatpush1.msra.mxu0 0.0
    %375 = vmatprep.subr.mxu0 0.0
    %376 = vmatpush1.msra.mxu0 0.0
    %377 = vmatprep.subr.mxu0 0.0
    %378 = vmatpush1.msra.mxu0 0.0
    %379 = vmatprep.subr.mxu0 0.0
    %380 = vmatpush1.msra.mxu0 0.0
    %381 = vmatprep.subr.mxu0 0.0
    %382 = vmatpush1.msra.mxu0 0.0
    %383 = vmatprep.subr.mxu0 0.0
    %384 = vmatpush1.msra.mxu0 0.0
    %385 = vmatprep.subr.mxu0 0.0
    %386 = vmatpush1.msra.mxu0 0.0
    %387 = vmatprep.subr.mxu0 0.0
    %388 = vmatpush1.msra.mxu0 0.0
    %389 = vmatprep.subr.mxu0 0.0
    %390 = vmatpush1.msra.mxu0 0.0
    %391 = vmatprep.subr.mxu0 0.0
    %392 = vmatpush1.msra.mxu0 0.0
    %393 = vmatprep.subr.mxu0 0.0
    %394 = vmatpush1.msra.mxu0 0.0
    %395 = vmatprep.subr.mxu0 0.0
    %396 = vmatpush1.msra.mxu0 0.0
    %397 = vmatprep.mubr.f32.mxu0 0.0
    %398 = vmatmul.mubr.f32.gmra.mrb[0].mxu0 %v251
    %v399 = vpop.f32.mrb[0].mxu0
    %v400 = vadd.f32 %v240, %v399
    %v401 = vpop.f32.mrb[0].mxu0
    %v402 = vadd.f32 %v244, %v401
    %403 = vmatprep.mubr.f32.mxu0 0.0
    %404 = vmatmul.mubr.f32.gmra.mrb[0].mxu0 %v254
    %v405 = vpop.f32.mrb[0].mxu0
    %v406 = vadd.f32 %v240, %v405
    %v407 = vpop.f32.mrb[0].mxu0
    %v408 = vadd.f32 %v244, %v407
    %409 = vdwg.mxu0
    %v410 = vmax.f32 %v323, 0.0
    %v411 = vmax.f32 %v325, 0.0
    %v412 = vmax.f32 %v400, 0.0
    %v413 = vmax.f32 %v402, 0.0
    %v414 = vmax.f32 %v329, 0.0
    %v415 = vmax.f32 %v331, 0.0
    %v416 = vmax.f32 %v406, 0.0
    %v417 = vmax.f32 %v408, 0.0
    %v418 = vld [vmem:[#allocation11] sm:$0xff]
    %v419 = vld [vmem:[#allocation11 + $0x8] sm:$0xff]
    %v420 = vld [vmem:[#allocation11 + $0x10] sm:$0xff]
    %v421 = vld [vmem:[#allocation11 + $0x18] sm:$0xff]
    %v422 = vld [vmem:[#allocation11 + $0x20] sm:$0xff]
    %v423 = vld [vmem:[#allocation11 + $0x28] sm:$0xff]
    %v424 = vld [vmem:[#allocation11 + $0x30] sm:$0xff]
    %v425 = vld [vmem:[#allocation11 + $0x38] sm:$0xff]
    %v426 = vld [vmem:[#allocation11 + $0x40] sm:$0xff]
    %v427 = vld [vmem:[#allocation11 + $0x48] sm:$0xff]
    %v428 = vld [vmem:[#allocation11 + $0x50] sm:$0xff]
    %v429 = vld [vmem:[#allocation11 + $0x58] sm:$0xff]
    %v430 = vld [vmem:[#allocation11 + $0x60] sm:$0xff]
    %v431 = vld [vmem:[#allocation11 + $0x68] sm:$0xff]
    %v432 = vld [vmem:[#allocation11 + $0x70] sm:$0xff]
    %v433 = vld [vmem:[#allocation11 + $0x78] sm:$0xff]
    %v434 = vld [vmem:[#allocation11 + $0x80] sm:$0xff]
    %v435 = vld [vmem:[#allocation11 + $0x88] sm:$0xff]
    %v436 = vld [vmem:[#allocation11 + $0x90] sm:$0xff]
    %v437 = vld [vmem:[#allocation11 + $0x98] sm:$0xff]
    %v438 = vld [vmem:[#allocation11 + $0xa0] sm:$0xff]
    %v439 = vld [vmem:[#allocation11 + $0xa8] sm:$0xff]
    %v440 = vld [vmem:[#allocation11 + $0xb0] sm:$0xff]
    %v441 = vld [vmem:[#allocation11 + $0xb8] sm:$0xff]
    %v442 = vld [vmem:[#allocation11 + $0xc0] sm:$0xff]
    %v443 = vld [vmem:[#allocation11 + $0xc8] sm:$0xff]
    %v444 = vld [vmem:[#allocation11 + $0xd0] sm:$0xff]
    %v445 = vld [vmem:[#allocation11 + $0xd8] sm:$0xff]
    %v446 = vld [vmem:[#allocation11 + $0xe0] sm:$0xff]
    %v447 = vld [vmem:[#allocation11 + $0xe8] sm:$0xff]
    %v448 = vld [vmem:[#allocation11 + $0xf0] sm:$0xff]
    %v449 = vld [vmem:[#allocation11 + $0xf8] sm:$0xff]
    %v450 = vld [vmem:[#allocation11 + $0x100] sm:$0xff]
    %v451 = vld [vmem:[#allocation11 + $0x108] sm:$0xff]
    %v452 = vld [vmem:[#allocation11 + $0x110] sm:$0xff]
    %v453 = vld [vmem:[#allocation11 + $0x118] sm:$0xff]
    %v454 = vld [vmem:[#allocation11 + $0x120] sm:$0xff]
    %v455 = vld [vmem:[#allocation11 + $0x128] sm:$0xff]
    %v456 = vld [vmem:[#allocation11 + $0x130] sm:$0xff]
    %v457 = vld [vmem:[#allocation11 + $0x138] sm:$0xff]
    %v458 = vld [vmem:[#allocation11 + $0x140] sm:$0xff]
    %v459 = vld [vmem:[#allocation11 + $0x148] sm:$0xff]
    %v460 = vld [vmem:[#allocation11 + $0x150] sm:$0xff]
    %v461 = vld [vmem:[#allocation11 + $0x158] sm:$0xff]
    %v462 = vld [vmem:[#allocation11 + $0x160] sm:$0xff]
    %v463 = vld [vmem:[#allocation11 + $0x168] sm:$0xff]
    %v464 = vld [vmem:[#allocation11 + $0x170] sm:$0xff]
    %v465 = vld [vmem:[#allocation11 + $0x178] sm:$0xff]
    %v466 = vld [vmem:[#allocation11 + $0x180] sm:$0xff]
    %v467 = vld [vmem:[#allocation11 + $0x188] sm:$0xff]
    %v468 = vld [vmem:[#allocation11 + $0x190] sm:$0xff]
    %v469 = vld [vmem:[#allocation11 + $0x198] sm:$0xff]
    %v470 = vld [vmem:[#allocation11 + $0x1a0] sm:$0xff]
    %v471 = vld [vmem:[#allocation11 + $0x1a8] sm:$0xff]
    %v472 = vld [vmem:[#allocation11 + $0x1b0] sm:$0xff]
    %v473 = vld [vmem:[#allocation11 + $0x1b8] sm:$0xff]
    %v474 = vld [vmem:[#allocation11 + $0x1c0] sm:$0xff]
    %v475 = vld [vmem:[#allocation11 + $0x1c8] sm:$0xff]
    %v476 = vld [vmem:[#allocation11 + $0x1d0] sm:$0xff]
    %v477 = vld [vmem:[#allocation11 + $0x1d8] sm:$0xff]
    %v478 = vld [vmem:[#allocation11 + $0x1e0] sm:$0xff]
    %v479 = vld [vmem:[#allocation11 + $0x1e8] sm:$0xff]
    %v480 = vld [vmem:[#allocation11 + $0x1f0] sm:$0xff]
    %v481 = vld [vmem:[#allocation11 + $0x1f8] sm:$0xff]
    %v482 = vld [vmem:[#allocation13] sm:$0x1]
    %v484 = vlaneseq
    %v485 = vshrl.u32 %v484, 7
    %v486 = vsub.s32 0, %v485
    %v487 = vrot.slane %v482, %v486
    %489 = vmatprep.subr.mxu0 0.0
    %490 = vmatpush1.msra.mxu0 %v418
    %491 = vmatprep.subr.mxu0 0.0
    %492 = vmatpush1.msra.mxu0 %v419
    %493 = vmatprep.subr.mxu0 0.0
    %494 = vmatpush1.msra.mxu0 %v420
    %495 = vmatprep.subr.mxu0 0.0
    %496 = vmatpush1.msra.mxu0 %v421
    %497 = vmatprep.subr.mxu0 0.0
    %498 = vmatpush1.msra.mxu0 %v422
    %499 = vmatprep.subr.mxu0 0.0
    %500 = vmatpush1.msra.mxu0 %v423
    %501 = vmatprep.subr.mxu0 0.0
    %502 = vmatpush1.msra.mxu0 %v424
    %503 = vmatprep.subr.mxu0 0.0
    %504 = vmatpush1.msra.mxu0 %v425
    %505 = vmatprep.subr.mxu0 0.0
    %506 = vmatpush1.msra.mxu0 %v426
    %507 = vmatprep.subr.mxu0 0.0
    %508 = vmatpush1.msra.mxu0 %v427
    %509 = vmatprep.subr.mxu0 0.0
    %510 = vmatpush1.msra.mxu0 %v428
    %511 = vmatprep.subr.mxu0 0.0
    %512 = vmatpush1.msra.mxu0 %v429
    %513 = vmatprep.subr.mxu0 0.0
    %514 = vmatpush1.msra.mxu0 %v430
    %515 = vmatprep.subr.mxu0 0.0
    %516 = vmatpush1.msra.mxu0 %v431
    %517 = vmatprep.subr.mxu0 0.0
    %518 = vmatpush1.msra.mxu0 %v432
    %519 = vmatprep.subr.mxu0 0.0
    %520 = vmatpush1.msra.mxu0 %v433
    %521 = vmatprep.subr.mxu0 0.0
    %522 = vmatpush1.msra.mxu0 %v434
    %523 = vmatprep.subr.mxu0 0.0
    %524 = vmatpush1.msra.mxu0 %v435
    %525 = vmatprep.subr.mxu0 0.0
    %526 = vmatpush1.msra.mxu0 %v436
    %527 = vmatprep.subr.mxu0 0.0
    %528 = vmatpush1.msra.mxu0 %v437
    %529 = vmatprep.subr.mxu0 0.0
    %530 = vmatpush1.msra.mxu0 %v438
    %531 = vmatprep.subr.mxu0 0.0
    %532 = vmatpush1.msra.mxu0 %v439
    %533 = vmatprep.subr.mxu0 0.0
    %534 = vmatpush1.msra.mxu0 %v440
    %535 = vmatprep.subr.mxu0 0.0
    %536 = vmatpush1.msra.mxu0 %v441
    %537 = vmatprep.subr.mxu0 0.0
    %538 = vmatpush1.msra.mxu0 %v442
    %539 = vmatprep.subr.mxu0 0.0
    %540 = vmatpush1.msra.mxu0 %v443
    %541 = vmatprep.subr.mxu0 0.0
    %542 = vmatpush1.msra.mxu0 %v444
    %543 = vmatprep.subr.mxu0 0.0
    %544 = vmatpush1.msra.mxu0 %v445
    %545 = vmatprep.subr.mxu0 0.0
    %546 = vmatpush1.msra.mxu0 %v446
    %547 = vmatprep.subr.mxu0 0.0
    %548 = vmatpush1.msra.mxu0 %v447
    %549 = vmatprep.subr.mxu0 0.0
    %550 = vmatpush1.msra.mxu0 %v448
    %551 = vmatprep.subr.mxu0 0.0
    %552 = vmatpush1.msra.mxu0 %v449
    %553 = vmatprep.mubr.f32.mxu0 %v411
    %554 = vmatmul.mubr.f32.gmra.mrb[0].mxu0 %v410
    %v555 = vpop.f32.mrb[0].mxu0
    %v556 = vadd.f32 %v487, %v555
    %v557 = vpop.f32.mrb[0].mxu0
    %558 = vmatprep.mubr.f32.mxu0 %v415
    %559 = vmatmul.mubr.f32.gmra.mrb[0].mxu0 %v414
    %v560 = vpop.f32.mrb[0].mxu0
    %v561 = vadd.f32 %v487, %v560
    %v562 = vpop.f32.mrb[0].mxu0
    %563 = vdwg.mxu0
    %564 = vmatprep.subr.mxu0 0.0
    %565 = vmatpush1.msra.mxu0 %v450
    %566 = vmatprep.subr.mxu0 0.0
    %567 = vmatpush1.msra.mxu0 %v451
    %568 = vmatprep.subr.mxu0 0.0
    %569 = vmatpush1.msra.mxu0 %v452
    %570 = vmatprep.subr.mxu0 0.0
    %571 = vmatpush1.msra.mxu0 %v453
    %572 = vmatprep.subr.mxu0 0.0
    %573 = vmatpush1.msra.mxu0 %v454
    %574 = vmatprep.subr.mxu0 0.0
    %575 = vmatpush1.msra.mxu0 %v455
    %576 = vmatprep.subr.mxu0 0.0
    %577 = vmatpush1.msra.mxu0 %v456
    %578 = vmatprep.subr.mxu0 0.0
    %579 = vmatpush1.msra.mxu0 %v457
    %580 = vmatprep.subr.mxu0 0.0
    %581 = vmatpush1.msra.mxu0 %v458
    %582 = vmatprep.subr.mxu0 0.0
    %583 = vmatpush1.msra.mxu0 %v459
    %584 = vmatprep.subr.mxu0 0.0
    %585 = vmatpush1.msra.mxu0 %v460
    %586 = vmatprep.subr.mxu0 0.0
    %587 = vmatpush1.msra.mxu0 %v461
    %588 = vmatprep.subr.mxu0 0.0
    %589 = vmatpush1.msra.mxu0 %v462
    %590 = vmatprep.subr.mxu0 0.0
    %591 = vmatpush1.msra.mxu0 %v463
    %592 = vmatprep.subr.mxu0 0.0
    %593 = vmatpush1.msra.mxu0 %v464
    %594 = vmatprep.subr.mxu0 0.0
    %595 = vmatpush1.msra.mxu0 %v465
    %596 = vmatprep.subr.mxu0 0.0
    %597 = vmatpush1.msra.mxu0 %v466
    %598 = vmatprep.subr.mxu0 0.0
    %599 = vmatpush1.msra.mxu0 %v467
    %600 = vmatprep.subr.mxu0 0.0
    %601 = vmatpush1.msra.mxu0 %v468
    %602 = vmatprep.subr.mxu0 0.0
    %603 = vmatpush1.msra.mxu0 %v469
    %604 = vmatprep.subr.mxu0 0.0
    %605 = vmatpush1.msra.mxu0 %v470
    %606 = vmatprep.subr.mxu0 0.0
    %607 = vmatpush1.msra.mxu0 %v471
    %608 = vmatprep.subr.mxu0 0.0
    %609 = vmatpush1.msra.mxu0 %v472
    %610 = vmatprep.subr.mxu0 0.0
    %611 = vmatpush1.msra.mxu0 %v473
    %612 = vmatprep.subr.mxu0 0.0
    %613 = vmatpush1.msra.mxu0 %v474
    %614 = vmatprep.subr.mxu0 0.0
    %615 = vmatpush1.msra.mxu0 %v475
    %616 = vmatprep.subr.mxu0 0.0
    %617 = vmatpush1.msra.mxu0 %v476
    %618 = vmatprep.subr.mxu0 0.0
    %619 = vmatpush1.msra.mxu0 %v477
    %620 = vmatprep.subr.mxu0 0.0
    %621 = vmatpush1.msra.mxu0 %v478
    %622 = vmatprep.subr.mxu0 0.0
    %623 = vmatpush1.msra.mxu0 %v479
    %624 = vmatprep.subr.mxu0 0.0
    %625 = vmatpush1.msra.mxu0 %v480
    %626 = vmatprep.subr.mxu0 0.0
    %627 = vmatpush1.msra.mxu0 %v481
    %628 = vmatprep.mubr.f32.mxu0 %v413
    %629 = vmatmul.mubr.f32.gmra.mrb[0].mxu0 %v412
    %v630 = vpop.f32.mrb[0].mxu0
    %v631 = vadd.f32 %v556, %v630
    %v632 = vpop.f32.mrb[0].mxu0
    %633 = vmatprep.mubr.f32.mxu0 %v417
    %634 = vmatmul.mubr.f32.gmra.mrb[0].mxu0 %v416
    %v635 = vpop.f32.mrb[0].mxu0
    %v636 = vadd.f32 %v561, %v635
    %v637 = vpop.f32.mrb[0].mxu0
    %638 = vdwg.mxu0
    %639 = vst [vmem:[#allocation14] sm:$0xff] %v631
    %640 = vst [vmem:[#allocation14 + $0x8] sm:$0xff] %v636
    // Predicated region
    $region58: #{tpu_custom_call.1} parent=1 // pred_check
      _
    $region59: #{tpu_custom_call.1} parent=1 // pred_check_branch
      %642 = sbr.rel (0) target = $region61
    $region60: #{tpu_custom_call.1} parent=1 // pred_region
      %s644 = ssub.s32 256, 256
      %645 = vsyncadd [#allocation4], %s644
      %s646 = sshll.u32 [#allocation14], 4
      %s647 = int_to_ptr.vmem [resolvable:$true] %s646
      %652 = dma.vmem_to_hbm [thread:$0]  %s647, 256, %s7, [#allocation4], 128, 128, 8
    $region61: #{tpu_custom_call.1} parent=1 // pred_fallthru
      _
    // Predicated region
    $region62: #{tpu_custom_call.1} parent=1 // pred_check
      _
    $region63: #{tpu_custom_call.1} parent=1 // pred_check_branch
      %654 = sbr.rel (0) target = $region65
    $region64: #{tpu_custom_call.1} parent=1 // pred_region
      %655 = dma.done [#allocation4], 256
    $region65: #{tpu_custom_call.1} parent=1 // pred_fallthru
      _
    %656 = vsyncpa [#allocation3], 1
    %657 = vsyncpa [#allocation6], 1
    %658 = vsyncpa [#allocation9], 1
    %659 = vsyncpa [#allocation12], 1
    %660 = vsyncpa [#allocation4], 1

</llo_original>
